<compile_context>
chip_gen: v7x
topology: tpu7x:2x2x1
jax: 0.10.0
libtpu: 0.0.40
codegen_flags: <defaults>
</compile_context>

<pallas_src>
import math
import functools

import jax
import jax.numpy as jnp
from jax.experimental import pallas as pl
from jax.experimental.pallas import tpu as pltpu


def _conv3x3_kernel(x_ref, w_ref, b_ref, o_ref, lhs_ref, *, C):
    """One batch element of the 3x3 'same' conv as a single banded matmul.

    x_ref  : (1, H, W*C)          bf16  input rows (channel-minor, lane-dense view)
    w_ref  : (3*(W+2)*C, W*F)     bf16  banded conv weight (built in the wrapper)
    b_ref  : (1, W*F)             f32   bias tiled along the output row
    o_ref  : (1, H, W*F)          f32   output rows (minor dim W*F = 256, lane-dense)
    lhs_ref: (H, 3*(W+2)*C)       bf16  VMEM scratch: row-im2col LHS
    """
    H = x_ref.shape[1]
    WC = x_ref.shape[2]          # W * C
    WpC = WC + 2 * C             # (W + 2) * C

    # Fused zero padding: zero the im2col buffer, then drop in the three vertically
    # shifted copies of the (horizontally halo-padded) input rows.  No jnp.pad, no
    # extra HBM pass — just masked VMEM stores at static offsets.
    lhs_ref[...] = jnp.zeros_like(lhs_ref)
    for ky in range(3):
        dy = ky - 1
        h0 = max(0, -dy)                 # first output row this tap contributes to
        hs = H - abs(dy)                 # number of valid rows for this tap
        lhs_ref[pl.ds(h0, hs), pl.ds(ky * WpC + C, WC)] = (
            x_ref[0, pl.ds(h0 + dy, hs), :]
        )

    # One MXU matmul: bf16 operands, f32 accumulation.  (H, 3*(W+2)*C) x (., W*F).
    acc = jnp.dot(lhs_ref[...], w_ref[...], preferred_element_type=jnp.float32)
    acc = acc + b_ref[...]               # bias epilogue kept in f32 (v5e-friendly)

    # Lane-dense store: minor dim W*F is a multiple of 128 -> unmasked vst, wide DMA.
    o_ref[0] = acc.astype(o_ref.dtype)


def conv3x3_pallas(x_nhwc, w_hwio, bias):
    """3x3 'same' convolution, NHWC in / NHWC out: (B,H,W,C) -> (B,H,W,F)."""
    B, H, W, C = x_nhwc.shape
    F = w_hwio.shape[-1]
    WC, WpC, WF = W * C, (W + 2) * C, W * F

    # Free row-major view: channels stay minor but W*C fills the lane axis
    # (C alone would occupy 4/128 lanes).  Cast to bf16 -> halves activation DMA.
    x_rows = x_nhwc.reshape(B, H, WC).astype(jnp.bfloat16)

    # Banded weight, built once in the wrapper (tiny):
    #   wband[ky*(W+2)*C + w'*C + c, w*F + f] = w_hwio[ky, w'-w, c, f]  if 0<=w'-w<3 else 0
    eye = jnp.eye(W, dtype=jnp.float32)
    wband5 = jnp.zeros((3, W + 2, C, W, F), jnp.float32)
    for kx in range(3):
        shift = jnp.zeros((W + 2, W), jnp.float32).at[kx:kx + W, :].set(eye)
        wband5 = wband5 + jnp.einsum("kcf,pw->kpcwf", w_hwio[:, kx], shift)
    wband = wband5.reshape(3 * WpC, WF).astype(jnp.bfloat16)

    # Bias replicated along the W*F output row so the epilogue is a plain broadcast add.
    bias_row = jnp.tile(bias.astype(jnp.float32), W).reshape(1, WF)

    flops = 2 * B * H * (3 * WpC) * WF
    bytes_accessed = (x_rows.size * 2 + wband.size * 2
                      + bias_row.size * 4 + B * H * WF * 4)
    cost = pl.CostEstimate(flops=flops, transcendentals=0,
                           bytes_accessed=bytes_accessed)

    out = pl.pallas_call(
        functools.partial(_conv3x3_kernel, C=C),
        out_shape=jax.ShapeDtypeStruct((B, H, WF), jnp.float32),
        grid_spec=pltpu.PrefetchScalarGridSpec(
            num_scalar_prefetch=0,
            grid=(B,),  # 2 parallel blocks -> both v7x TensorCores get work
            in_specs=[
                pl.BlockSpec((1, H, WC), lambda b: (b, 0, 0)),
                pl.BlockSpec((3 * WpC, WF), lambda b: (0, 0)),  # VMEM-resident weight
                pl.BlockSpec((1, WF), lambda b: (0, 0)),
            ],
            out_specs=pl.BlockSpec((1, H, WF), lambda b: (b, 0, 0)),
            scratch_shapes=[pltpu.VMEM((H, 3 * WpC), jnp.bfloat16)],
        ),
        compiler_params=pltpu.CompilerParams(
            dimension_semantics=("parallel",),
        ),
        cost_estimate=cost,
    )(x_rows, wband, bias_row)

    return out.reshape(B, H, W, F)


def pixel_shuffle_nhwc_to_nchw(y_nhwc, r=2):
    """PixelShuffle(r) fused with the NHWC->NCHW conversion (a single transpose)."""
    B, H, W, Frr = y_nhwc.shape
    C = Frr // (r * r)
    y = y_nhwc.reshape(B, H, W, C, r, r)          # channel o = c*r*r + i*r + j
    y = jnp.transpose(y, (0, 3, 1, 4, 2, 5))      # (B, C, H, r, W, r)
    return y.reshape(B, C, H * r, W * r)


def upsampler_forward(x_nchw, w_oihw, bias):
    """Upsampler_module.forward: conv3x3 (C -> 4C, padding=1) then PixelShuffle(2).

    x_nchw: (B, C, H, W) -> (B, C, 2H, 2W)
    """
    x_nhwc = jnp.transpose(x_nchw, (0, 2, 3, 1))   # NCHW -> NHWC (layout glue)
    w_hwio = jnp.transpose(w_oihw, (2, 3, 1, 0))   # OIHW -> HWIO
    y_nhwc = conv3x3_pallas(x_nhwc, w_hwio, bias)  # (B, H, W, 4C)
    return pixel_shuffle_nhwc_to_nchw(y_nhwc, r=2) # (B, C, 2H, 2W)


def _reference_forward(x_nchw, w_oihw, bias):
    """Pure-JAX reference (lax conv + PixelShuffle) for correctness checking."""
    y = jax.lax.conv_general_dilated(
        x_nchw, w_oihw,
        window_strides=(1, 1),
        padding=((1, 1), (1, 1)),
        dimension_numbers=("NCHW", "OIHW", "NCHW"),
    )
    y = y + bias.reshape(1, -1, 1, 1)
    B, Crr, H, W = y.shape
    C = Crr // 4
    y = y.reshape(B, C, 2, 2, H, W)
    y = jnp.transpose(y, (0, 1, 4, 2, 5, 3))
    return y.reshape(B, C, 2 * H, 2 * W)


if __name__ == "__main__":
    # Small shapes consistent with the module: n_feats=4, batch=2, spatial=16.
    B, n_feats, H, W = 2, 4, 16, 16
    C_out = n_feats * 4

    key = jax.random.PRNGKey(0)
    kx, kw, kb = jax.random.split(key, 3)

    x = jax.random.normal(kx, (B, n_feats, H, W), dtype=jnp.float32)

    # nn.Conv2d default init (uniform +/- 1/sqrt(fan_in)).
    fan_in = n_feats * 3 * 3
    bound = 1.0 / math.sqrt(fan_in)
    w = jax.random.uniform(kw, (C_out, n_feats, 3, 3), jnp.float32, -bound, bound)
    b = jax.random.uniform(kb, (C_out,), jnp.float32, -bound, bound)

    # Round x / w to bf16-representable values so the bf16-MXU kernel and the f32
    # reference see identical operands (keeps the tolerance tight while the kernel
    # still exercises the bf16 datapath with f32 accumulation).
    x = x.astype(jnp.bfloat16).astype(jnp.float32)
    w = w.astype(jnp.bfloat16).astype(jnp.float32)

    fwd = jax.jit(upsampler_forward)
    out = jax.block_until_ready(fwd(x, w, b))
    ref = jax.block_until_ready(_reference_forward(x, w, b))

    assert out.shape == (B, n_feats, 2 * H, 2 * W), out.shape
    max_err = float(jnp.max(jnp.abs(out - ref)))
    assert jnp.allclose(out, ref, atol=2e-3, rtol=2e-3), max_err

    print("KERNEL_OK")
</pallas_src>

<mosaic_0001>
module attributes {stable_mosaic.version = 11 : i64} {
  func.func @_conv3x3_kernel(%arg0: i32, %arg1: memref<1x16x64xbf16, #tpu.memory_space<vmem>>, %arg2: memref<216x256xbf16, #tpu.memory_space<vmem>>, %arg3: memref<1x256xf32, #tpu.memory_space<vmem>>, %arg4: memref<1x16x256xf32, #tpu.memory_space<vmem>>, %arg5: memref<16x216xbf16, #tpu.memory_space<vmem>>) attributes {dimension_semantics = [#tpu.dimension_semantics<parallel>], iteration_bounds = array<i64: 2>, scalar_prefetch = 0 : i64, scratch_operands = 1 : i64, tpu.core_type = #tpu.core_type<tc>, window_params = [{transform_indices = @transform_0, window_bounds = array<i64: 1, 16, 64>}, {pipeline_mode = #tpu.pipeline_mode<synchronous>, transform_indices = @transform_1, window_bounds = array<i64: 216, 256>}, {pipeline_mode = #tpu.pipeline_mode<synchronous>, transform_indices = @transform_2, window_bounds = array<i64: 1, 256>}, {transform_indices = @transform_3, window_bounds = array<i64: 1, 16, 256>}]} {
    %cst = arith.constant 0.000000e+00 : bf16
    %0 = vector.broadcast %cst : bf16 to vector<16x216xbf16>
    %c0 = arith.constant 0 : index
    %c0_0 = arith.constant 0 : index
    %1 = vector.load %arg5[%c0, %c0_0] : memref<16x216xbf16, #tpu.memory_space<vmem>>, vector<16x216xbf16>
    tpu.vector_store %arg5[%c0, %c0_0], %0 {strides = array<i32>} : memref<16x216xbf16, #tpu.memory_space<vmem>>, vector<16x216xbf16>,
    %c0_1 = arith.constant 0 : index
    %c0_2 = arith.constant 0 : index
    %c0_3 = arith.constant 0 : index
    %2 = vector.load %arg1[%c0_1, %c0_2, %c0_3] : memref<1x16x64xbf16, #tpu.memory_space<vmem>>, vector<1x15x64xbf16>
    %3 = vector.shape_cast %2 : vector<1x15x64xbf16> to vector<15x64xbf16>
    %c1 = arith.constant 1 : index
    %c4 = arith.constant 4 : index
    %4 = vector.load %arg5[%c1, %c4] : memref<16x216xbf16, #tpu.memory_space<vmem>>, vector<15x64xbf16>
    tpu.vector_store %arg5[%c1, %c4], %3 {strides = array<i32>} : memref<16x216xbf16, #tpu.memory_space<vmem>>, vector<15x64xbf16>,
    %c0_4 = arith.constant 0 : index
    %c0_5 = arith.constant 0 : index
    %c0_6 = arith.constant 0 : index
    %5 = vector.load %arg1[%c0_4, %c0_5, %c0_6] : memref<1x16x64xbf16, #tpu.memory_space<vmem>>, vector<1x16x64xbf16>
    %6 = vector.shape_cast %5 : vector<1x16x64xbf16> to vector<16x64xbf16>
    %c0_7 = arith.constant 0 : index
    %c76 = arith.constant 76 : index
    %7 = vector.load %arg5[%c0_7, %c76] : memref<16x216xbf16, #tpu.memory_space<vmem>>, vector<16x64xbf16>
    tpu.vector_store %arg5[%c0_7, %c76], %6 {strides = array<i32>} : memref<16x216xbf16, #tpu.memory_space<vmem>>, vector<16x64xbf16>,
    %c0_8 = arith.constant 0 : index
    %c1_9 = arith.constant 1 : index
    %c0_10 = arith.constant 0 : index
    %8 = vector.load %arg1[%c0_8, %c1_9, %c0_10] : memref<1x16x64xbf16, #tpu.memory_space<vmem>>, vector<1x15x64xbf16>
    %9 = vector.shape_cast %8 : vector<1x15x64xbf16> to vector<15x64xbf16>
    %c0_11 = arith.constant 0 : index
    %c148 = arith.constant 148 : index
    %10 = vector.load %arg5[%c0_11, %c148] : memref<16x216xbf16, #tpu.memory_space<vmem>>, vector<15x64xbf16>
    tpu.vector_store %arg5[%c0_11, %c148], %9 {strides = array<i32>} : memref<16x216xbf16, #tpu.memory_space<vmem>>, vector<15x64xbf16>,
    %c0_12 = arith.constant 0 : index
    %c0_13 = arith.constant 0 : index
    %11 = vector.load %arg5[%c0_12, %c0_13] : memref<16x216xbf16, #tpu.memory_space<vmem>>, vector<16x216xbf16>
    %c0_14 = arith.constant 0 : index
    %c0_15 = arith.constant 0 : index
    %12 = vector.load %arg2[%c0_14, %c0_15] : memref<216x256xbf16, #tpu.memory_space<vmem>>, vector<216x256xbf16>
    %cst_16 = arith.constant dense<0.000000e+00> : vector<16x256xf32>
    %13 = tpu.matmul %11, %12, %cst_16 {dimension_numbers = #tpu.dot_dimension_numbers<[1], [0], [0], [1], [0, 0, 1, 1], [], []>} : vector<16x216xbf16>, vector<216x256xbf16>, vector<16x256xf32> -> vector<16x256xf32>
    %c0_17 = arith.constant 0 : index
    %c0_18 = arith.constant 0 : index
    %14 = vector.load %arg3[%c0_17, %c0_18] : memref<1x256xf32, #tpu.memory_space<vmem>>, vector<1x256xf32>
    %15 = vector.broadcast %14 : vector<1x256xf32> to vector<16x256xf32>
    %16 = arith.addf %13, %15 : vector<16x256xf32>
    %c0_19 = arith.constant 0 : index
    %c0_20 = arith.constant 0 : index
    %c0_21 = arith.constant 0 : index
    %17 = vector.load %arg4[%c0_19, %c0_20, %c0_21] : memref<1x16x256xf32, #tpu.memory_space<vmem>>, vector<1x16x256xf32>
    %18 = vector.shape_cast %17 : vector<1x16x256xf32> to vector<16x256xf32>
    %19 = vector.shape_cast %16 : vector<16x256xf32> to vector<1x16x256xf32>
    tpu.vector_store %arg4[%c0_19, %c0_20, %c0_21], %19 {strides = array<i32>} : memref<1x16x256xf32, #tpu.memory_space<vmem>>, vector<1x16x256xf32>,
    return
  }
  func.func @transform_0(%arg0: i32) -> (i32, i32, i32) {
    %c0_i32 = arith.constant 0 : i32
    %c0_i32_0 = arith.constant 0 : i32
    %c0_i32_1 = arith.constant 0 : i32
    return %arg0, %c0_i32, %c0_i32_0 : i32, i32, i32
  }
  func.func @transform_1(%arg0: i32) -> (i32, i32) {
    %c0_i32 = arith.constant 0 : i32
    %c0_i32_0 = arith.constant 0 : i32
    %c0_i32_1 = arith.constant 0 : i32
    return %c0_i32, %c0_i32_0 : i32, i32
  }
  func.func @transform_2(%arg0: i32) -> (i32, i32) {
    %c0_i32 = arith.constant 0 : i32
    %c0_i32_0 = arith.constant 0 : i32
    %c0_i32_1 = arith.constant 0 : i32
    return %c0_i32, %c0_i32_0 : i32, i32
  }
  func.func @transform_3(%arg0: i32) -> (i32, i32, i32) {
    %c0_i32 = arith.constant 0 : i32
    %c0_i32_0 = arith.constant 0 : i32
    %c0_i32_1 = arith.constant 0 : i32
    return %arg0, %c0_i32, %c0_i32_0 : i32, i32, i32
  }
}

</mosaic_0001>

<llo_original>
// kernel: tile.8
$region0: #{tile.8}
  #allocation2 [shape = 's32[1]{0}', space=sflag, size = 0x4, scoped, tag = 'scoped memory for tile.8']
  %s0 = inlined_call_operand.hbm [shape: f32[16], index: 0, kind: input, shape index: {}]
  %s1 = inlined_call_operand.vmem [shape: f32[16,16], index: 1, kind: output, shape index: {}]
  $region1: #{tile.8} parent=0
    #allocation0 [shape = 'u8[512]{0}', space=vmem, size = 0x400, scoped, tag = 'operand span for operand 0']
    #allocation1 [shape = 's32[1]{0}', space=sflag, size = 0x4, scoped, tag = 'scoped memory for tile.8']
    %2 = vsyncpa [#allocation1], 0
    // Predicated region
    $region2: #{tile.8} parent=1 // pred_check
      _
    $region3: #{tile.8} parent=1 // pred_check_branch
      %4 = sbr.rel (0) target = $region5
    $region4: #{tile.8} parent=1 // pred_region
      %s6 = ssub.s32 16, 16
      %7 = vsyncadd [#allocation1], %s6
      %s9 = sshll.u32 [#allocation0], 4
      %s10 = int_to_ptr.vmem [resolvable:$true] %s9
      %12 = dma.hbm_to_vmem [thread:$0]  %s0, 16, %s10, [#allocation1]
    $region5: #{tile.8} parent=1 // pred_fallthru
      _
    // Predicated region
    $region6: #{tile.8} parent=1 // pred_check
      _
    $region7: #{tile.8} parent=1 // pred_check_branch
      %14 = sbr.rel (0) target = $region9
    $region8: #{tile.8} parent=1 // pred_region
      %15 = dma.done [#allocation1], 16
    $region9: #{tile.8} parent=1 // pred_fallthru
      _
    %v16 = vld [vmem:[#allocation0] ss:$0 sm:$0xff]
    %17 = vst [vmem:[%s1] sm:$0xff] %v16
    %s18 = scalar_lea.vmem %s1, 8
    %19 = vst [vmem:[%s18] sm:$0xff] %v16
    %20 = vsyncpa [#allocation1], 1

// kernel: tile.9
$region0: #{tile.9}
  %s0 = inlined_call_operand.vmem [shape: f32[16,16], index: 0, kind: input, shape index: {}]
  %s1 = inlined_call_operand.vmem [shape: f32[1,256], index: 1, kind: output, shape index: {}]
  $region1: #{tile.9} parent=0
    #allocation0 [shape = 'u8[8192]{0}', space=vmem, size = 0x2000, scoped, tag = 'scoped mem for output reshape']
    %s2 = smov 3
    %v3 = vld [vmem:[%s0] ss:$8 sm:%s2]
    %vm4 = vcmask 130048
    %5 = vst.msk [vmem:[#allocation0] ss:$8 sm:$0x3] %vm4, %v3
    %s6 = scalar_lea.vmem %s0, 7
    %s7 = smov 3
    %v8 = vld [vmem:[%s6] ss:$8 sm:%s7]
    %9 = vrot.lane.b32.xlu0 %v8, 112
    %v10 = vpop.permute.xlu0 %9
    %vm11 = vcmask 1048448
    %12 = vst.msk [vmem:[#allocation0] ss:$8 sm:$0x3] %vm11, %v10
    %s13 = scalar_lea.vmem %s0, 6
    %s14 = smov 3
    %v15 = vld [vmem:[%s13] ss:$8 sm:%s14]
    %16 = vrot.lane.b32.xlu0 %v15, 96
    %v17 = vpop.permute.xlu0 %16
    %vm18 = vcmask 917248
    %19 = vst.msk [vmem:[#allocation0] ss:$8 sm:$0x3] %vm18, %v17
    %s20 = scalar_lea.vmem %s0, 5
    %s21 = smov 3
    %v22 = vld [vmem:[%s20] ss:$8 sm:%s21]
    %23 = vrot.lane.b32.xlu0 %v22, 80
    %v24 = vpop.permute.xlu0 %23
    %vm25 = vcmask 786048
    %26 = vst.msk [vmem:[#allocation0] ss:$8 sm:$0x3] %vm25, %v24
    %s27 = scalar_lea.vmem %s0, 4
    %s28 = smov 3
    %v29 = vld [vmem:[%s27] ss:$8 sm:%s28]
    %30 = vrot.lane.b32.xlu0 %v29, 64
    %v31 = vpop.permute.xlu0 %30
    %vm32 = vcmask 654848
    %33 = vst.msk [vmem:[#allocation0] ss:$8 sm:$0x3] %vm32, %v31
    %s34 = scalar_lea.vmem %s0, 3
    %s35 = smov 3
    %v36 = vld [vmem:[%s34] ss:$8 sm:%s35]
    %37 = vrot.lane.b32.xlu0 %v36, 48
    %v38 = vpop.permute.xlu0 %37
    %vm39 = vcmask 523648
    %40 = vst.msk [vmem:[#allocation0] ss:$8 sm:$0x3] %vm39, %v38
    %s41 = scalar_lea.vmem %s0, 2
    %s42 = smov 3
    %v43 = vld [vmem:[%s41] ss:$8 sm:%s42]
    %44 = vrot.lane.b32.xlu0 %v43, 32
    %v45 = vpop.permute.xlu0 %44
    %vm46 = vcmask 392448
    %47 = vst.msk [vmem:[#allocation0] ss:$8 sm:$0x3] %vm46, %v45
    %s48 = scalar_lea.vmem %s0, 1
    %s49 = smov 3
    %v50 = vld [vmem:[%s48] ss:$8 sm:%s49]
    %51 = vrot.lane.b32.xlu0 %v50, 16
    %v52 = vpop.permute.xlu0 %51
    %vm53 = vcmask 261248
    %54 = vst.msk [vmem:[#allocation0] ss:$8 sm:$0x3] %vm53, %v52
    %s56 = sshllo.u32 0, 1
    %v58 = vld [vmem:[#allocation0] sm:%s56]
    %s59 = sshllo.u32 0, 1
    %60 = vst [vmem:[%s1] sm:%s59] %v58
    %s61 = scalar_lea.vmem [#allocation0], 8
    %v62 = vld [vmem:[%s61] sm:%s56]
    %s63 = sshllo.u32 0, 1
    %s64 = scalar_lea.vmem %s1, 1
    %65 = vst [vmem:[%s64] sm:%s63] %v62

// kernel: upsampler_forward.1
$region0: #{upsampler_forward.1}
  #allocation0 [shape = 'u32[]', space=smem, size = 0x4, offset = 0x4, fixed_abs, tag = 'smem constant byte address 0x4 - core index']
  #allocation1 [shape = 'u32[144,128]{1,0:T(1,128)}', space=vmem, size = 0x12000, scoped, tag = 'internal scratch']
  #allocation2 [shape = 'bf16[16,216]{1,0:T(16,128)(2,1)}', space=vmem, size = 0x2000, scoped, tag = 'scratch operand']
  %s0 = inlined_call_operand.vmem [shape: bf16[2,16,64], index: 0, kind: input, shape index: {}]
  %s1 = inlined_call_operand.vmem [shape: bf16[216,256], index: 1, kind: input, shape index: {}]
  %s2 = inlined_call_operand.vmem [shape: f32[1,256], index: 2, kind: input, shape index: {}]
  %s3 = inlined_call_operand.vmem [shape: f32[2,16,256], index: 3, kind: output, shape index: {}]
  %s4 = sld [smem:[#allocation0]]
  $region45: #{upsampler_forward.1} parent=0
    _
  %s6 = ssub.s32 1, %s4
  %s7 = scalar_select 0, %s6, %s4
  loop: start=0, step=1, limit=4
  $region2: #{upsampler_forward.1} parent=0 // loop_pre_header
    _
  $region3: #{upsampler_forward.1} parent=0 // loop_header
    %s9 = sphi 0, %s13
    %p10 = scmp.ge.s32.totalorder %s9, 4
    %s19 = sphi 0, %s21
    %s22 = sphi 0, %s19
    %s23 = sphi 0, %s22
    %s39 = sphi 0, %s23
    %s43 = sphi 0, %s43
    %s45 = sphi 0, %s43
    %s46 = sphi 0, %s45
    %s60 = sphi 0, %s46
    %s64 = sphi 0, %s64
    %s66 = sphi 0, %s64
    %s67 = sphi 0, %s66
    %s81 = sphi 0, %s67
    %s87 = sphi 0, %s89
    %s90 = sphi 0, %s87
    %s91 = sphi 0, %s90
    %s107 = sphi 0, %s91
  $region4: #{upsampler_forward.1} parent=0 // loop_header_branch
    %12 = sbr.rel (%p10) target = $region8
  $region5: #{upsampler_forward.1} parent=0 // loop_body
    %s14 = ssub.s32 %s9, 1
    %s15 = ssub.s32 %s9, 2
    %s16 = sadd.s32 %s9, 1
    %s17 = ssub.s32 %s9, %s16
    %p18 = scmp.eq.s32.totalorder %s17, 0
    %s20 = sadd.s32 %s19, 1
    %s21 = scalar_select %p18, %s19, %s20
    %p24 = pneg %p18
    %p25 = scmp.eq.s32.totalorder %s9, 1
    %p26 = por %p24, %p25
    %p27 = scmp.ne.s32.totalorder %s19, %s22
    %p28 = scmp.eq.s32.totalorder %s9, 0
    %p29 = por %p27, %p28
    %p30 = scmp.ne.s32.totalorder %s19, %s22
    %p31 = scmp.eq.s32.totalorder %s14, 1
    %p32 = por %p30, %p31
    %p33 = scmp.ne.s32.totalorder %s22, %s23
    %p34 = scmp.eq.s32.totalorder %s14, 0
    %p35 = por %p33, %p34
    %p36 = scmp.ne.s32.totalorder %s22, %s23
    %p37 = scmp.eq.s32.totalorder %s15, 1
    %p38 = por %p36, %p37
    %p40 = scmp.ne.s32.totalorder %s23, %s39
    %p41 = scmp.eq.s32.totalorder %s15, 0
    %p42 = por %p40, %p41
    %s44 = sadd.s32 %s43, 1
    %p47 = scmp.eq.s32.totalorder %s9, 1
    %p48 = scmp.ne.s32.totalorder %s43, %s45
    %p49 = scmp.eq.s32.totalorder %s9, 0
    %p50 = por %p48, %p49
    %p51 = scmp.ne.s32.totalorder %s43, %s45
    %p52 = scmp.eq.s32.totalorder %s14, 1
    %p53 = por %p51, %p52
    %p54 = scmp.ne.s32.totalorder %s45, %s46
    %p55 = scmp.eq.s32.totalorder %s14, 0
    %p56 = por %p54, %p55
    %p57 = scmp.ne.s32.totalorder %s45, %s46
    %p58 = scmp.eq.s32.totalorder %s15, 1
    %p59 = por %p57, %p58
    %p61 = scmp.ne.s32.totalorder %s46, %s60
    %p62 = scmp.eq.s32.totalorder %s15, 0
    %p63 = por %p61, %p62
    %s65 = sadd.s32 %s64, 1
    %p68 = scmp.eq.s32.totalorder %s9, 1
    %p69 = scmp.ne.s32.totalorder %s64, %s66
    %p70 = scmp.eq.s32.totalorder %s9, 0
    %p71 = por %p69, %p70
    %p72 = scmp.ne.s32.totalorder %s64, %s66
    %p73 = scmp.eq.s32.totalorder %s14, 1
    %p74 = por %p72, %p73
    %p75 = scmp.ne.s32.totalorder %s66, %s67
    %p76 = scmp.eq.s32.totalorder %s14, 0
    %p77 = por %p75, %p76
    %p78 = scmp.ne.s32.totalorder %s66, %s67
    %p79 = scmp.eq.s32.totalorder %s15, 1
    %p80 = por %p78, %p79
    %p82 = scmp.ne.s32.totalorder %s67, %s81
    %p83 = scmp.eq.s32.totalorder %s15, 0
    %p84 = por %p82, %p83
    %s85 = ssub.s32 %s9, %s16
    %p86 = scmp.eq.s32.totalorder %s85, 0
    %s88 = sadd.s32 %s87, 1
    %s89 = scalar_select %p86, %s87, %s88
    %p92 = pneg %p86
    %p93 = scmp.eq.s32.totalorder %s9, 1
    %p94 = por %p92, %p93
    %p95 = scmp.ne.s32.totalorder %s87, %s90
    %p96 = scmp.eq.s32.totalorder %s9, 0
    %p97 = por %p95, %p96
    %p98 = scmp.ne.s32.totalorder %s87, %s90
    %p99 = scmp.eq.s32.totalorder %s14, 1
    %p100 = por %p98, %p99
    %p101 = scmp.ne.s32.totalorder %s90, %s91
    %p102 = scmp.eq.s32.totalorder %s14, 0
    %p103 = por %p101, %p102
    %p104 = scmp.ne.s32.totalorder %s90, %s91
    %p105 = scmp.eq.s32.totalorder %s15, 1
    %p106 = por %p104, %p105
    %p108 = scmp.ne.s32.totalorder %s91, %s107
    %p109 = scmp.eq.s32.totalorder %s15, 0
    %p110 = por %p108, %p109
    %p111 = scmp.le.s32.totalorder 1, %s9
    %p112 = scmp.lt.s32.totalorder %s9, 3
    %p113 = pnand %p111, %p112
    %p114 = pneg %p113
    // Predicated region
    $region9: #{upsampler_forward.1} parent=5 // pred_check
      _
    $region10: #{upsampler_forward.1} parent=5 // pred_check_branch
      %116 = sbr.rel (%p113) target = $region12
    $region11: #{upsampler_forward.1} parent=5 // pred_region
      %s117 = ssub.s32 %s9, 1
      // Predicated region
      $region13: #{upsampler_forward.1} parent=11 // pred_check
        %p118 = pneg %p56
      $region14: #{upsampler_forward.1} parent=11 // pred_check_branch
        %120 = sbr.rel (%p118) target = $region16
      $region15: #{upsampler_forward.1} parent=11 // pred_region
        _
      $region16: #{upsampler_forward.1} parent=11 // pred_fallthru
        _
      // Predicated region
      $region17: #{upsampler_forward.1} parent=11 // pred_check
        %p121 = pneg %p77
      $region18: #{upsampler_forward.1} parent=11 // pred_check_branch
        %123 = sbr.rel (%p121) target = $region20
      $region19: #{upsampler_forward.1} parent=11 // pred_region
        _
      $region20: #{upsampler_forward.1} parent=11 // pred_fallthru
        _
    $region12: #{upsampler_forward.1} parent=5 // pred_fallthru
      _
    %p124 = scmp.lt.s32.totalorder %s9, 2
    // Predicated region
    $region21: #{upsampler_forward.1} parent=5 // pred_check
      %p125 = pneg %p124
    $region22: #{upsampler_forward.1} parent=5 // pred_check_branch
      %127 = sbr.rel (%p125) target = $region24
    $region23: #{upsampler_forward.1} parent=5 // pred_region
      // Predicated region
      $region25: #{upsampler_forward.1} parent=23 // pred_check
        %p128 = pneg %p29
      $region26: #{upsampler_forward.1} parent=23 // pred_check_branch
        %130 = sbr.rel (%p128) target = $region28
      $region27: #{upsampler_forward.1} parent=23 // pred_region
        %p131 = scmp.lt.s32.totalorder %s9, 1
        %s132 = scalar_select %p131, %s9, 1
        %s133 = smul.addr %s132, 2
        %s134 = smul.addr %s133, 4
        %s135 = scalar_lea.vmem %s0, %s134
      $region28: #{upsampler_forward.1} parent=23 // pred_fallthru
        _
    $region24: #{upsampler_forward.1} parent=5 // pred_fallthru
      _
    %p136 = scmp.le.s32.totalorder 1, %s9
    %p137 = scmp.lt.s32.totalorder %s9, 3
    %p138 = pnand %p136, %p137
    %p139 = pneg %p138
    // Predicated region
    $region29: #{upsampler_forward.1} parent=5 // pred_check
      _
    $region30: #{upsampler_forward.1} parent=5 // pred_check_branch
      %141 = sbr.rel (%p138) target = $region32
    $region31: #{upsampler_forward.1} parent=5 // pred_region
      %s142 = ssub.s32 %s9, 1
      %p143 = scmp.lt.s32.totalorder %s14, 1
      %s144 = scalar_select %p143, %s14, 1
      %s145 = smul.addr %s144, 2
      %s146 = smul.addr %s145, 4
      %s147 = scalar_lea.vmem %s0, %s146
      %p148 = pneg %p35
      %p149 = pneg %p32
      %p150 = pneg %p56
      %p151 = pneg %p53
      %p152 = pneg %p77
      %p153 = pneg %p74
      %p154 = pneg %p103
      %p155 = pneg %p100
      %p156 = scmp.lt.s32.totalorder %s14, 1
      %s157 = scalar_select %p156, %s14, 1
      %s158 = smul.addr %s157, 4
      %s159 = smul.addr %s158, 8
      %s160 = scalar_lea.vmem %s3, %s159
      %p161 = scmp.lt.s32.totalorder %s14, 1
      %s162 = scalar_select %p161, %s14, 1
      %s163 = smul.addr %s162, 2
      %s164 = smul.addr %s163, 4
      %s165 = scalar_lea.vmem %s0, %s164
      %p166 = scmp.lt.s32.totalorder %s14, 1
      %s167 = scalar_select %p166, %s14, 1
      %s168 = smul.addr %s167, 4
      %s169 = smul.addr %s168, 8
      %s170 = scalar_lea.vmem %s3, %s169
      %172 = vst [vmem:[#allocation2] sm:$0xff] 0
      %vm173 = vcmask 719872
      %174 = vst.msk [vmem:[#allocation2 + $0x8] sm:$0xff] %vm173, 0
      %v175 = vld [vmem:[%s165] sm:$0xf]
      %v176 = vld [vmem:[%s165 + $0x4] sm:$0xf]
      %v179 = vunpack.c.l.b16 %v175
      %v180 = vunpack.c.l.b16 %v176
      %v181 = vpack.c.b16 %v180, %v179
      %v183 = vshrl.u32 %v181, 16
      %v185 = vrot.slane %v183, 7
      %v186 = vshll.u32 %v181, 16
      %v188 = vor.u32 %v185, %v186
      %189 = vrot.lane.b32.xlu0 %v188, 4
      %v190 = vpop.permute.xlu0 %189
      %vm192 = vcmask 556064
      %vm193 = vsmask.f32 7938
      %vm194 = vmand %vm192, %vm193
      %v195 = vld [vmem:[#allocation2] sm:$0xff]
      %v196 = vsel %vm194, %v190, %v195
      %197 = vst [vmem:[#allocation2] sm:$0xff] %v196
      %v198 = vld [vmem:[%s165] sm:$0xf]
      %v199 = vld [vmem:[%s165 + $0x4] sm:$0xf]
      %v202 = vunpack.c.l.b16 %v198
      %v203 = vunpack.c.l.b16 %v199
      %v204 = vpack.c.b16 %v203, %v202
      %205 = vrot.lane.b32.xlu0 %v204, 76
      %v206 = vpop.permute.xlu0 %205
      %vm208 = vcmask 1048160
      %209 = vst.msk [vmem:[#allocation2] sm:$0xff] %vm208, %v206
      %vm210 = vcmask 97280
      %211 = vst.msk [vmem:[#allocation2 + $0x8] sm:$0xff] %vm210, %v206
      %v212 = vld [vmem:[%s165] sm:$0xf]
      %v213 = vld [vmem:[%s165 + $0x4] sm:$0xf]
      %v216 = vunpack.c.l.b16 %v212
      %v217 = vunpack.c.l.b16 %v213
      %v218 = vpack.c.b16 %v217, %v216
      %v220 = vshrl.u32 %v218, 16
      %v222 = vshll.u32 %v218, 16
      %v224 = vrot.slane %v222, 1
      %v225 = vor.u32 %v220, %v224
      %226 = vrot.lane.b32.xlu0 %v225, 20
      %v227 = vpop.permute.xlu0 %226
      %vm229 = vcmask 687264
      %vm230 = vsmask.f32 7424
      %vm231 = vmand %vm229, %vm230
      %v232 = vld [vmem:[#allocation2 + $0x8] sm:$0xff]
      %v233 = vsel %vm231, %v227, %v232
      %234 = vst [vmem:[#allocation2 + $0x8] sm:$0xff] %v233
      %v235 = vld [vmem:[#allocation2] sm:$0xff]
      %v236 = vld [vmem:[#allocation2 + $0x8] sm:$0xff]
      %v237 = vld [vmem:[%s1] sm:$0xff]
      %v238 = vld [vmem:[%s1 + $0x8] sm:$0xff]
      %v239 = vld [vmem:[%s1 + $0x10] sm:$0xff]
      %v240 = vld [vmem:[%s1 + $0x18] sm:$0xff]
      %v241 = vld [vmem:[%s1 + $0x20] sm:$0xff]
      %v242 = vld [vmem:[%s1 + $0x28] sm:$0xff]
      %v243 = vld [vmem:[%s1 + $0x30] sm:$0xff]
      %v244 = vld [vmem:[%s1 + $0x38] sm:$0xff]
      %v245 = vld [vmem:[%s1 + $0x40] sm:$0xff]
      %v246 = vld [vmem:[%s1 + $0x48] sm:$0xff]
      %v247 = vld [vmem:[%s1 + $0x50] sm:$0xff]
      %v248 = vld [vmem:[%s1 + $0x58] sm:$0xff]
      %v249 = vld [vmem:[%s1 + $0x60] sm:$0xff]
      %v250 = vld [vmem:[%s1 + $0x68] sm:$0xff]
      %v251 = vld [vmem:[%s1 + $0x70] sm:$0xff]
      %v252 = vld [vmem:[%s1 + $0x78] sm:$0xff]
      %v253 = vld [vmem:[%s1 + $0x80] sm:$0xff]
      %v254 = vld [vmem:[%s1 + $0x88] sm:$0xff]
      %v255 = vld [vmem:[%s1 + $0x90] sm:$0xff]
      %v256 = vld [vmem:[%s1 + $0x98] sm:$0xff]
      %v257 = vld [vmem:[%s1 + $0xa0] sm:$0xff]
      %v258 = vld [vmem:[%s1 + $0xa8] sm:$0xff]
      %v259 = vld [vmem:[%s1 + $0xb0] sm:$0xff]
      %v260 = vld [vmem:[%s1 + $0xb8] sm:$0xff]
      %v261 = vld [vmem:[%s1 + $0xc0] sm:$0xff]
      %v262 = vld [vmem:[%s1 + $0xc8] sm:$0xff]
      %v263 = vld [vmem:[%s1 + $0xd0] sm:$0xff]
      %v264 = vld [vmem:[%s2] sm:$0x3]
      %v266 = vlaneseq
      %v267 = vshrl.u32 %v266, 7
      %v268 = vsub.s32 0, %v267
      %v269 = vrot.slane %v264, %v268
      %v270 = vlaneseq
      %v271 = vshrl.u32 %v270, 7
      %v272 = vsub.s32 1, %v271
      %v273 = vrot.slane %v264, %v272
      %v303 = vunpack.c.l.b16 %v237
      %v304 = vunpack.c.h.b16 %v237
      %v305 = vunpack.c.l.b16 %v238
      %v306 = vunpack.c.h.b16 %v238
      %v307 = vunpack.c.l.b16 %v239
      %v308 = vunpack.c.h.b16 %v239
      %v309 = vunpack.c.l.b16 %v240
      %v310 = vunpack.c.h.b16 %v240
      %v311 = vunpack.c.l.b16 %v241
      %v312 = vunpack.c.h.b16 %v241
      %v313 = vunpack.c.l.b16 %v242
      %v314 = vunpack.c.h.b16 %v242
      %v315 = vunpack.c.l.b16 %v243
      %v316 = vunpack.c.h.b16 %v243
      %v317 = vunpack.c.l.b16 %v244
      %v318 = vunpack.c.h.b16 %v244
      %v319 = vunpack.c.l.b16 %v245
      %v320 = vunpack.c.h.b16 %v245
      %v321 = vunpack.c.l.b16 %v246
      %v322 = vunpack.c.h.b16 %v246
      %v323 = vunpack.c.l.b16 %v247
      %v324 = vunpack.c.h.b16 %v247
      %v325 = vunpack.c.l.b16 %v248
      %v326 = vunpack.c.h.b16 %v248
      %v327 = vunpack.c.l.b16 %v249
      %v328 = vunpack.c.h.b16 %v249
      %v329 = vunpack.c.l.b16 %v250
      %v330 = vunpack.c.h.b16 %v250
      %v331 = vunpack.c.l.b16 %v251
      %v332 = vunpack.c.h.b16 %v251
      %v333 = vunpack.c.l.b16 %v252
      %v334 = vunpack.c.h.b16 %v252
      %v335 = vunpack.c.l.b16 %v253
      %v336 = vunpack.c.h.b16 %v253
      %v337 = vunpack.c.l.b16 %v254
      %v338 = vunpack.c.h.b16 %v254
      %v339 = vunpack.c.l.b16 %v255
      %v340 = vunpack.c.h.b16 %v255
      %v341 = vunpack.c.l.b16 %v256
      %v342 = vunpack.c.h.b16 %v256
      %v343 = vunpack.c.l.b16 %v257
      %v344 = vunpack.c.h.b16 %v257
      %v345 = vunpack.c.l.b16 %v258
      %v346 = vunpack.c.h.b16 %v258
      %v347 = vunpack.c.l.b16 %v259
      %v348 = vunpack.c.h.b16 %v259
      %v349 = vunpack.c.l.b16 %v260
      %v350 = vunpack.c.h.b16 %v260
      %v351 = vunpack.c.l.b16 %v261
      %v352 = vunpack.c.h.b16 %v261
      %v353 = vunpack.c.l.b16 %v262
      %v354 = vunpack.c.h.b16 %v262
      %v355 = vunpack.c.l.b16 %v263
      %v356 = vunpack.c.h.b16 %v263
      %v357 = vpack.c.b16 %v305, %v303
      %v358 = vpack.c.b16 %v306, %v304
      %v359 = vpack.c.b16 %v309, %v307
      %v360 = vpack.c.b16 %v310, %v308
      %v361 = vpack.c.b16 %v313, %v311
      %v362 = vpack.c.b16 %v314, %v312
      %v363 = vpack.c.b16 %v317, %v315
      %v364 = vpack.c.b16 %v318, %v316
      %v365 = vpack.c.b16 %v321, %v319
      %v366 = vpack.c.b16 %v322, %v320
      %v367 = vpack.c.b16 %v325, %v323
      %v368 = vpack.c.b16 %v326, %v324
      %v369 = vpack.c.b16 %v329, %v327
      %v370 = vpack.c.b16 %v330, %v328
      %v371 = vpack.c.b16 %v333, %v331
      %v372 = vpack.c.b16 %v334, %v332
      %v373 = vpack.c.b16 %v337, %v335
      %v374 = vpack.c.b16 %v338, %v336
      %v375 = vpack.c.b16 %v341, %v339
      %v376 = vpack.c.b16 %v342, %v340
      %v377 = vpack.c.b16 %v345, %v343
      %v378 = vpack.c.b16 %v346, %v344
      %v379 = vpack.c.b16 %v349, %v347
      %v380 = vpack.c.b16 %v350, %v348
      %v381 = vpack.c.b16 %v353, %v351
      %v382 = vpack.c.b16 %v354, %v352
      %v383 = vpack.c.b16 %v355, %v355
      %v384 = vpack.c.b16 %v356, %v356
      %v412 = vsel %vm173, %v236, 0
      %vm414 = vcmask 1043456
      %v416 = vsel %vm414, %v383, 0
      %v419 = vsel %vm414, %v384, 0
      %421 = vmatprep.subr.bf16.mxu0 %v358
      %422 = vmatpush1.bf16.msra.mxu0 %v357
      %423 = vmatprep.subr.bf16.mxu0 %v360
      %424 = vmatpush1.bf16.msra.mxu0 %v359
      %425 = vmatprep.subr.bf16.mxu0 %v362
      %426 = vmatpush1.bf16.msra.mxu0 %v361
      %427 = vmatprep.subr.bf16.mxu0 %v364
      %428 = vmatpush1.bf16.msra.mxu0 %v363
      %429 = vmatprep.subr.bf16.mxu0 %v366
      %430 = vmatpush1.bf16.msra.mxu0 %v365
      %431 = vmatprep.subr.bf16.mxu0 %v368
      %432 = vmatpush1.bf16.msra.mxu0 %v367
      %433 = vmatprep.subr.bf16.mxu0 %v370
      %434 = vmatpush1.bf16.msra.mxu0 %v369
      %435 = vmatprep.subr.bf16.mxu0 %v372
      %436 = vmatpush1.bf16.msra.mxu0 %v371
      %437 = vmatprep.subr.bf16.mxu0 %v374
      %438 = vmatpush1.bf16.msra.mxu0 %v373
      %439 = vmatprep.subr.bf16.mxu0 %v376
      %440 = vmatpush1.bf16.msra.mxu0 %v375
      %441 = vmatprep.subr.bf16.mxu0 %v378
      %442 = vmatpush1.bf16.msra.mxu0 %v377
      %443 = vmatprep.subr.bf16.mxu0 %v380
      %444 = vmatpush1.bf16.msra.mxu0 %v379
      %445 = vmatprep.subr.bf16.mxu0 %v382
      %446 = vmatpush1.bf16.msra.mxu0 %v381
      %447 = vmatprep.subr.bf16.mxu0 %v419
      %448 = vmatpush1.bf16.msra.mxu0 %v416
      %449 = vmatprep.subr.bf16.mxu0 0
      %450 = vmatpush1.bf16.msra.mxu0 0
      %451 = vmatprep.subr.bf16.mxu0 0
      %452 = vmatpush1.bf16.msra.mxu0 0
      %453 = vmatprep.mubr.bf16.mxu0 %v412
      %454 = vmatmul.mubr.bf16.gmra.mrb[0].mxu0 %v235
      %v455 = vpop.f32.mrb[0].mxu0
      %v456 = vadd.f32 %v269, %v455
      %v457 = vpop.f32.mrb[0].mxu0
      %v458 = vadd.f32 %v273, %v457
      %v459 = vpop.f32.mrb[0].mxu0
      %v460 = vadd.f32 %v269, %v459
      %v461 = vpop.f32.mrb[0].mxu0
      %v462 = vadd.f32 %v273, %v461
      %463 = vdwg.mxu0
      %464 = vst [vmem:[%s170] sm:$0xff] %v456
      %465 = vst [vmem:[%s170 + $0x8] sm:$0xff] %v458
      %466 = vst [vmem:[%s170 + $0x10] sm:$0xff] %v460
      %467 = vst [vmem:[%s170 + $0x18] sm:$0xff] %v462
      %p468 = scmp.lt.s32.totalorder %s14, 1
      %s469 = scalar_select %p468, %s14, 1
      %s470 = smul.addr %s469, 4
      %s471 = smul.addr %s470, 8
      %s472 = scalar_lea.vmem %s3, %s471
      // Predicated region
      $region33: #{upsampler_forward.1} parent=31 // pred_check
        %p473 = pneg %p100
      $region34: #{upsampler_forward.1} parent=31 // pred_check_branch
        %475 = sbr.rel (%p473) target = $region36
      $region35: #{upsampler_forward.1} parent=31 // pred_region
        _
      $region36: #{upsampler_forward.1} parent=31 // pred_fallthru
        _
    $region32: #{upsampler_forward.1} parent=5 // pred_fallthru
      _
    %p476 = scmp.le.s32.totalorder 2, %s9
    // Predicated region
    $region37: #{upsampler_forward.1} parent=5 // pred_check
      %p477 = pneg %p476
    $region38: #{upsampler_forward.1} parent=5 // pred_check_branch
      %479 = sbr.rel (%p477) target = $region40
    $region39: #{upsampler_forward.1} parent=5 // pred_region
      %s480 = ssub.s32 %s9, 2
      // Predicated region
      $region41: #{upsampler_forward.1} parent=39 // pred_check
        %p481 = pneg %p106
      $region42: #{upsampler_forward.1} parent=39 // pred_check_branch
        %483 = sbr.rel (%p481) target = $region44
      $region43: #{upsampler_forward.1} parent=39 // pred_region
        %p484 = scmp.lt.s32.totalorder %s15, 1
        %s485 = scalar_select %p484, %s15, 1
        %s486 = smul.addr %s485, 4
        %s487 = smul.addr %s486, 8
        %s488 = scalar_lea.vmem %s3, %s487
      $region44: #{upsampler_forward.1} parent=39 // pred_fallthru
        _
    $region40: #{upsampler_forward.1} parent=5 // pred_fallthru
      _
  $region6: #{upsampler_forward.1} parent=0 // loop_footer
    %s13 = sadd.s32 1, %s9
  $region7: #{upsampler_forward.1} parent=0 // loop_footer_branch
    %8 = sbr.rel target = $region3
  $region8: #{upsampler_forward.1} parent=0 // loop_exit
    _

</llo_original>
